<compile_context>
chip_gen: v7x
topology: tpu7x:2x2x1
jax: 0.10.0
libtpu: 0.0.40
codegen_flags: <defaults>
</compile_context>

<pallas_src>
import functools

import numpy as np
import jax
import jax.numpy as jnp
from jax.experimental import pallas as pl
from jax.experimental.pallas import tpu as pltpu


def _round_up(x, m):
    return ((x + m - 1) // m) * m


# ----------------------------------------------------------------------------
# Pass 1: conv-as-matmul (bf16 operands, f32 acc) + FBS mask + BN sum/sumsq stats
# ----------------------------------------------------------------------------
def _conv_mask_stats_kernel(patches_ref, w_ref, mask_ref, out_ref, sum_ref, sq_ref):
    # (TM, Kp) @ (Kp, Cp) on the MXU, f32 accumulation.
    conv = jnp.dot(patches_ref[...], w_ref[...], preferred_element_type=jnp.float32)

    # FBS sparse output mask: one (1, Cp) row per sample in this tile, broadcast
    # over the Ho*Wo spatial rows belonging to that sample (no (M, Cout) mask in HBM).
    s_per_tile = mask_ref.shape[0]            # static
    tm, cp = conv.shape
    hw = tm // s_per_tile
    masked = (conv.reshape(s_per_tile, hw, cp) * mask_ref[...]).reshape(tm, cp)

    out_ref[...] = masked

    # Full-batch BatchNorm statistics: accumulate per-channel sum / sum-of-squares
    # across the grid into resident (1, Cp) blocks (grid axis is "arbitrary").
    @pl.when(pl.program_id(0) == 0)
    def _init():
        sum_ref[...] = jnp.zeros_like(sum_ref)
        sq_ref[...] = jnp.zeros_like(sq_ref)

    sum_ref[...] += jnp.sum(masked, axis=0, keepdims=True)
    sq_ref[...] += jnp.sum(masked * masked, axis=0, keepdims=True)


# ----------------------------------------------------------------------------
# Pass 2: folded BatchNorm affine (precomputed scale/shift) + LeakyReLU(0.2)
# ----------------------------------------------------------------------------
def _bn_lrelu_kernel(x_ref, scale_ref, shift_ref, out_ref):
    y = x_ref[...] * scale_ref[...] + shift_ref[...]
    out_ref[...] = jnp.maximum(y, 0.2 * y)    # LeakyReLU(0.2), f32 VPU math


# ----------------------------------------------------------------------------
# Tile-size heuristic: whole samples per tile, sized well inside scoped VMEM
# (budget chosen so double-buffered tiles also fit v7x's smaller 64 MiB VMEM).
# ----------------------------------------------------------------------------
def _pick_samples_per_tile(n, hw, kp, cp, vmem_budget_bytes=8 * 1024 * 1024):
    if hw % 8 != 0:
        return n                              # single full-extent tile (always legal)
    bytes_per_row = 2 * (kp * 2) + 2 * (cp * 4)   # double-buffered bf16 in + f32 out
    max_rows = max(hw, vmem_budget_bytes // bytes_per_row)
    best = 1
    for s in range(1, n + 1):
        if n % s == 0 and s * hw <= max_rows:
            best = s
    return best


# ----------------------------------------------------------------------------
# Wrapper: FBS saliency / TTQ ternarization / im2col glue + two pallas_calls
# ----------------------------------------------------------------------------
@functools.partial(jax.jit, static_argnames=("CR", "samples_per_tile"))
def basic_block_forward(x, params, CR=0.8, samples_per_tile=None):
    N, Cin, H, W = x.shape
    w = params["conv_weight"]                   # (Cout, Cin, KH, KW), conv bias=False
    Cout, _, KH, KW = w.shape
    stride, pad = 2, 1                          # hardcoded in FBS_TTQ_CNN.forward
    Ho = (H + 2 * pad - KH) // stride + 1
    Wo = (W + 2 * pad - KW) // stride + 1
    HW = Ho * Wo
    M = N * HW
    K = Cin * KH * KW
    Kp = _round_up(K, 128)                      # MXU-friendly contraction dim
    Cp = _round_up(Cout, 128)                   # lane-dense output channels

    # ---- FBS saliency & per-(sample, out-channel) sparse mask (tiny; JAX) ----
    # TODO(synk): top-k channel selection has no clean Pallas equivalent; stays in lax.top_k.
    subsample = jnp.mean(jnp.abs(x), axis=(2, 3))                     # (N, Cin)
    sal = jnp.abs(subsample @ params["sal_w"].T + params["sal_b"])    # (N, Cout)
    k = int(np.round(Cout * CR))
    thr = jax.lax.top_k(sal, k)[0][:, -1]                             # (N,)
    mask_nc = sal * (sal > thr[:, None]).astype(sal.dtype)            # (N, Cout)
    mask_p = jnp.pad(mask_nc, ((0, 0), (0, Cp - Cout))).reshape(N, 1, Cp)

    # ---- TTQ ternarization of the conv weight (tiny; JAX) ----
    thresh = 0.05 * jnp.max(jnp.abs(w))
    tw = (params["pos"] * (w > thresh).astype(w.dtype)
          + params["neg"] * (w < -thresh).astype(w.dtype))
    w_mat = jnp.pad(tw.reshape(Cout, K).T, ((0, Kp - K), (0, Cp - Cout)))
    w_mat = w_mat.astype(jnp.bfloat16)                                # (Kp, Cp)

    # ---- im2col built directly in (n, ho, wo, c*kh*kw) order, emitted in bf16 ----
    # TODO(synk): patch extraction could be pulled in-kernel via manual strided DMA
    # over padded x; kept here as fused XLA slices/stack.
    xp = jnp.pad(x, ((0, 0), (0, 0), (pad, pad), (pad, pad)))
    x_nhwc = xp.transpose(0, 2, 3, 1).astype(jnp.bfloat16)            # (N, H+2, W+2, Cin)
    cols = jnp.stack(
        [x_nhwc[:, kh:kh + stride * Ho:stride, kw:kw + stride * Wo:stride, :]
         for kh in range(KH) for kw in range(KW)],
        axis=-1)                                                      # (N, Ho, Wo, Cin, KH*KW)
    patches = cols.reshape(M, K)                                      # flatten order (c, kh, kw)
    patches = jnp.pad(patches, ((0, 0), (0, Kp - K)))                 # (M, Kp) bf16

    # ---- tiling over M (whole samples per tile) ----
    if samples_per_tile is None:
        samples_per_tile = _pick_samples_per_tile(N, HW, Kp, Cp)
    assert N % samples_per_tile == 0, (N, samples_per_tile)
    TM = samples_per_tile * HW                  # multiple of 8 when Ho*Wo is
    num_tiles = M // TM

    vmem_limit = 32 * 1024 * 1024               # safe scoped-VMEM cap on v5e/v6e/v7x

    # -------------------- pass 1: matmul + mask + BN stats --------------------
    masked_flat, csum, csq = pl.pallas_call(
        _conv_mask_stats_kernel,
        out_shape=(jax.ShapeDtypeStruct((M, Cp), jnp.float32),
                   jax.ShapeDtypeStruct((1, Cp), jnp.float32),
                   jax.ShapeDtypeStruct((1, Cp), jnp.float32)),
        grid=(num_tiles,),
        in_specs=[
            pl.BlockSpec((TM, Kp), lambda i: (i, 0)),                       # patches tile
            pl.BlockSpec((Kp, Cp), lambda i: (0, 0)),                       # weights (resident)
            pl.BlockSpec((samples_per_tile, 1, Cp), lambda i: (i, 0, 0)),   # per-sample mask
        ],
        out_specs=[
            pl.BlockSpec((TM, Cp), lambda i: (i, 0)),                       # masked conv tile
            pl.BlockSpec((1, Cp), lambda i: (0, 0)),                        # resident sum acc
            pl.BlockSpec((1, Cp), lambda i: (0, 0)),                        # resident sumsq acc
        ],
        compiler_params=pltpu.CompilerParams(
            dimension_semantics=("arbitrary",),        # stats accumulator needs sequential grid
            vmem_limit_bytes=vmem_limit),
        cost_estimate=pl.CostEstimate(
            flops=2 * M * Kp * Cp,
            transcendentals=0,
            bytes_accessed=M * Kp * 2 + Kp * Cp * 2 + N * Cp * 4 + M * Cp * 4 + 2 * Cp * 4),
    )(patches, w_mat, mask_p)

    # ---- fold full-batch BN (training-mode, biased var, eps=1e-5) into scale/shift ----
    gamma_p = jnp.pad(params["bn_gamma"], (0, Cp - Cout), constant_values=1.0)
    beta_p = jnp.pad(params["bn_beta"], (0, Cp - Cout))
    mean = csum[0] / M
    var = jnp.maximum(csq[0] / M - mean * mean, 0.0)   # f32 accumulation; clamp cancellation
    rstd = jax.lax.rsqrt(var + 1e-5)
    scale = (gamma_p * rstd).reshape(1, Cp)
    shift = (beta_p - mean * gamma_p * rstd).reshape(1, Cp)

    # -------------------- pass 2: normalize + LeakyReLU (in place) --------------------
    out_flat = pl.pallas_call(
        _bn_lrelu_kernel,
        out_shape=jax.ShapeDtypeStruct((M, Cp), jnp.float32),
        grid=(num_tiles,),
        in_specs=[
            pl.BlockSpec((TM, Cp), lambda i: (i, 0)),
            pl.BlockSpec((1, Cp), lambda i: (0, 0)),
            pl.BlockSpec((1, Cp), lambda i: (0, 0)),
        ],
        out_specs=pl.BlockSpec((TM, Cp), lambda i: (i, 0)),
        input_output_aliases={0: 0},                    # reuse the masked-conv buffer
        compiler_params=pltpu.CompilerParams(
            dimension_semantics=("parallel",),          # independent tiles (2 TCs on v7x)
            vmem_limit_bytes=vmem_limit),
        cost_estimate=pl.CostEstimate(
            flops=3 * M * Cp,
            transcendentals=0,
            bytes_accessed=2 * M * Cp * 4 + 2 * Cp * 4),
    )(masked_flat, scale, shift)

    # Slice off channel padding, back to NCHW (public API matches the PyTorch module).
    return out_flat[:, :Cout].reshape(N, Ho, Wo, Cout).transpose(0, 3, 1, 2)


# ----------------------------------------------------------------------------
# Pure-JAX reference (for correctness checks)
# ----------------------------------------------------------------------------
def basic_block_reference(x, params, CR=0.8, conv_dtype=jnp.float32):
    """conv_dtype=bfloat16 matches the kernel's MXU operand precision (f32 acc);
    conv_dtype=float32 is the exact original-module math."""
    w = params["conv_weight"]
    Cout = w.shape[0]
    subsample = jnp.mean(jnp.abs(x), axis=(2, 3))
    sal = jnp.abs(subsample @ params["sal_w"].T + params["sal_b"])
    k = int(np.round(Cout * CR))
    thr = jax.lax.top_k(sal, k)[0][:, -1]
    mask_nc = sal * (sal > thr[:, None]).astype(sal.dtype)
    thresh = 0.05 * jnp.max(jnp.abs(w))
    tw = (params["pos"] * (w > thresh).astype(w.dtype)
          + params["neg"] * (w < -thresh).astype(w.dtype))
    conv = jax.lax.conv_general_dilated(
        x.astype(conv_dtype), tw.astype(conv_dtype),
        window_strides=(2, 2), padding=((1, 1), (1, 1)),
        dimension_numbers=("NCHW", "OIHW", "NCHW"),
        preferred_element_type=jnp.float32)
    out = mask_nc[:, :, None, None] * conv
    mean = out.mean(axis=(0, 2, 3), keepdims=True)
    var = ((out - mean) ** 2).mean(axis=(0, 2, 3), keepdims=True)
    y = ((out - mean) * jax.lax.rsqrt(var + 1e-5)
         * params["bn_gamma"].reshape(1, -1, 1, 1)
         + params["bn_beta"].reshape(1, -1, 1, 1))
    return jnp.where(y >= 0, y, 0.2 * y)


# ----------------------------------------------------------------------------
# Deterministic parameter init + run
# ----------------------------------------------------------------------------
def init_params(key, inplanes, planes, kernel_size=4):
    ks = jax.random.split(key, 6)
    return {
        "conv_weight": 0.1 * jax.random.normal(
            ks[0], (planes, inplanes, kernel_size, kernel_size), jnp.float32),
        "sal_w": 0.1 * jax.random.normal(ks[1], (planes, inplanes), jnp.float32),
        "sal_b": 0.1 * jax.random.normal(ks[2], (planes,), jnp.float32),
        "pos": jax.random.uniform(ks[3], (), jnp.float32),
        "neg": -jax.random.uniform(ks[4], (), jnp.float32),
        "bn_gamma": jnp.ones((planes,), jnp.float32),
        "bn_beta": jnp.zeros((planes,), jnp.float32),
    }


if __name__ == "__main__":
    key = jax.random.PRNGKey(0)
    kx, kparam = jax.random.split(key)

    N, Cin, Cout, H, W = 2, 4, 8, 16, 16
    x = jax.random.normal(kx, (N, Cin, H, W), jnp.float32)
    params = init_params(kparam, Cin, Cout, kernel_size=4)

    # samples_per_tile=1 -> grid=(2,): exercises the tiled BN-stat accumulation path.
    out = basic_block_forward(x, params, CR=0.8, samples_per_tile=1)
    out = jax.block_until_ready(out)
    assert out.shape == (N, Cout, H // 2, W // 2), out.shape

    # Tight check vs a reference matching the kernel's bf16 MXU operands (f32 acc).
    ref_bf16 = basic_block_reference(x, params, CR=0.8, conv_dtype=jnp.bfloat16)
    np.testing.assert_allclose(np.asarray(out), np.asarray(ref_bf16), rtol=1e-3, atol=1e-3)

    # Loose sanity check vs the exact f32 module math (bf16 matmul operands introduce
    # small quantization-level differences).
    ref_f32 = basic_block_reference(x, params, CR=0.8, conv_dtype=jnp.float32)
    np.testing.assert_allclose(np.asarray(out), np.asarray(ref_f32), rtol=5e-2, atol=5e-2)

    print("KERNEL_OK")
</pallas_src>

<mosaic_0001>
module attributes {stable_mosaic.version = 11 : i64} {
  func.func @_conv_mask_stats_kernel(%arg0: i32, %arg1: memref<64x128xbf16, #tpu.memory_space<vmem>>, %arg2: memref<128x128xbf16, #tpu.memory_space<vmem>>, %arg3: memref<1x1x128xf32, #tpu.memory_space<vmem>>, %arg4: memref<64x128xf32, #tpu.memory_space<vmem>>, %arg5: memref<1x128xf32, #tpu.memory_space<vmem>>, %arg6: memref<1x128xf32, #tpu.memory_space<vmem>>) attributes {dimension_semantics = [#tpu.dimension_semantics<arbitrary>], iteration_bounds = array<i64: 2>, scalar_prefetch = 0 : i64, scratch_operands = 0 : i64, tpu.core_type = #tpu.core_type<tc>, window_params = [{transform_indices = @transform_0, window_bounds = array<i64: 64, 128>}, {pipeline_mode = #tpu.pipeline_mode<synchronous>, transform_indices = @transform_1, window_bounds = array<i64: 128, 128>}, {transform_indices = @transform_2, window_bounds = array<i64: 1, 1, 128>}, {transform_indices = @transform_3, window_bounds = array<i64: 64, 128>}, {pipeline_mode = #tpu.pipeline_mode<synchronous>, transform_indices = @transform_4, window_bounds = array<i64: 1, 128>}, {pipeline_mode = #tpu.pipeline_mode<synchronous>, transform_indices = @transform_5, window_bounds = array<i64: 1, 128>}]} {
    %c0 = arith.constant 0 : index
    %c0_0 = arith.constant 0 : index
    %0 = vector.load %arg1[%c0, %c0_0] : memref<64x128xbf16, #tpu.memory_space<vmem>>, vector<64x128xbf16>
    %c0_1 = arith.constant 0 : index
    %c0_2 = arith.constant 0 : index
    %1 = vector.load %arg2[%c0_1, %c0_2] : memref<128x128xbf16, #tpu.memory_space<vmem>>, vector<128x128xbf16>
    %cst = arith.constant dense<0.000000e+00> : vector<64x128xf32>
    %2 = tpu.matmul %0, %1, %cst {dimension_numbers = #tpu.dot_dimension_numbers<[1], [0], [0], [1], [0, 0, 1, 1], [], []>} : vector<64x128xbf16>, vector<128x128xbf16>, vector<64x128xf32> -> vector<64x128xf32>
    %3 = vector.shape_cast %2 : vector<64x128xf32> to vector<1x64x128xf32>
    %c0_3 = arith.constant 0 : index
    %c0_4 = arith.constant 0 : index
    %c0_5 = arith.constant 0 : index
    %4 = vector.load %arg3[%c0_3, %c0_4, %c0_5] : memref<1x1x128xf32, #tpu.memory_space<vmem>>, vector<1x1x128xf32>
    %5 = vector.broadcast %4 : vector<1x1x128xf32> to vector<1x64x128xf32>
    %6 = arith.mulf %3, %5 : vector<1x64x128xf32>
    %7 = vector.shape_cast %6 : vector<1x64x128xf32> to vector<64x128xf32>
    %c0_6 = arith.constant 0 : index
    %c0_7 = arith.constant 0 : index
    %8 = vector.load %arg4[%c0_6, %c0_7] : memref<64x128xf32, #tpu.memory_space<vmem>>, vector<64x128xf32>
    tpu.vector_store %arg4[%c0_6, %c0_7], %7 {strides = array<i32>} : memref<64x128xf32, #tpu.memory_space<vmem>>, vector<64x128xf32>,
    %c0_i32 = arith.constant 0 : i32
    %9 = arith.cmpi eq, %arg0, %c0_i32 : i32
    %10 = arith.extui %9 : i1 to i32
    %c0_i32_8 = arith.constant 0 : i32
    %11 = arith.cmpi ne, %10, %c0_i32_8 : i32
    scf.if %11 {
      %cst_19 = arith.constant 0.000000e+00 : f32
      %23 = vector.broadcast %cst_19 : f32 to vector<1x128xf32>
      %c0_20 = arith.constant 0 : index
      %c0_21 = arith.constant 0 : index
      %24 = vector.load %arg5[%c0_20, %c0_21] : memref<1x128xf32, #tpu.memory_space<vmem>>, vector<1x128xf32>
      tpu.vector_store %arg5[%c0_20, %c0_21], %23 {strides = array<i32>} : memref<1x128xf32, #tpu.memory_space<vmem>>, vector<1x128xf32>,
      %cst_22 = arith.constant 0.000000e+00 : f32
      %25 = vector.broadcast %cst_22 : f32 to vector<1x128xf32>
      %c0_23 = arith.constant 0 : index
      %c0_24 = arith.constant 0 : index
      %26 = vector.load %arg6[%c0_23, %c0_24] : memref<1x128xf32, #tpu.memory_space<vmem>>, vector<1x128xf32>
      tpu.vector_store %arg6[%c0_23, %c0_24], %25 {strides = array<i32>} : memref<1x128xf32, #tpu.memory_space<vmem>>, vector<1x128xf32>,
    } else {
    }
    %c0_9 = arith.constant 0 : index
    %c0_10 = arith.constant 0 : index
    %12 = vector.load %arg5[%c0_9, %c0_10] : memref<1x128xf32, #tpu.memory_space<vmem>>, vector<1x128xf32>
    %cst_11 = arith.constant dense<0.000000e+00> : vector<128xf32>
    %13 = vector.multi_reduction <add>, %7, %cst_11 [0] : vector<64x128xf32> to vector<128xf32>
    %14 = vector.shape_cast %13 : vector<128xf32> to vector<1x128xf32>
    %15 = arith.addf %12, %14 : vector<1x128xf32>
    %c0_12 = arith.constant 0 : index
    %c0_13 = arith.constant 0 : index
    %16 = vector.load %arg5[%c0_12, %c0_13] : memref<1x128xf32, #tpu.memory_space<vmem>>, vector<1x128xf32>
    tpu.vector_store %arg5[%c0_12, %c0_13], %15 {strides = array<i32>} : memref<1x128xf32, #tpu.memory_space<vmem>>, vector<1x128xf32>,
    %c0_14 = arith.constant 0 : index
    %c0_15 = arith.constant 0 : index
    %17 = vector.load %arg6[%c0_14, %c0_15] : memref<1x128xf32, #tpu.memory_space<vmem>>, vector<1x128xf32>
    %18 = arith.mulf %7, %7 : vector<64x128xf32>
    %cst_16 = arith.constant dense<0.000000e+00> : vector<128xf32>
    %19 = vector.multi_reduction <add>, %18, %cst_16 [0] : vector<64x128xf32> to vector<128xf32>
    %20 = vector.shape_cast %19 : vector<128xf32> to vector<1x128xf32>
    %21 = arith.addf %17, %20 : vector<1x128xf32>
    %c0_17 = arith.constant 0 : index
    %c0_18 = arith.constant 0 : index
    %22 = vector.load %arg6[%c0_17, %c0_18] : memref<1x128xf32, #tpu.memory_space<vmem>>, vector<1x128xf32>
    tpu.vector_store %arg6[%c0_17, %c0_18], %21 {strides = array<i32>} : memref<1x128xf32, #tpu.memory_space<vmem>>, vector<1x128xf32>,
    return
  }
  func.func @transform_0(%arg0: i32) -> (i32, i32) {
    %c0_i32 = arith.constant 0 : i32
    %c0_i32_0 = arith.constant 0 : i32
    return %arg0, %c0_i32 : i32, i32
  }
  func.func @transform_1(%arg0: i32) -> (i32, i32) {
    %c0_i32 = arith.constant 0 : i32
    %c0_i32_0 = arith.constant 0 : i32
    %c0_i32_1 = arith.constant 0 : i32
    return %c0_i32, %c0_i32_0 : i32, i32
  }
  func.func @transform_2(%arg0: i32) -> (i32, i32, i32) {
    %c0_i32 = arith.constant 0 : i32
    %c0_i32_0 = arith.constant 0 : i32
    %c0_i32_1 = arith.constant 0 : i32
    return %arg0, %c0_i32, %c0_i32_0 : i32, i32, i32
  }
  func.func @transform_3(%arg0: i32) -> (i32, i32) {
    %c0_i32 = arith.constant 0 : i32
    %c0_i32_0 = arith.constant 0 : i32
    return %arg0, %c0_i32 : i32, i32
  }
  func.func @transform_4(%arg0: i32) -> (i32, i32) {
    %c0_i32 = arith.constant 0 : i32
    %c0_i32_0 = arith.constant 0 : i32
    %c0_i32_1 = arith.constant 0 : i32
    return %c0_i32, %c0_i32_0 : i32, i32
  }
  func.func @transform_5(%arg0: i32) -> (i32, i32) {
    %c0_i32 = arith.constant 0 : i32
    %c0_i32_0 = arith.constant 0 : i32
    %c0_i32_1 = arith.constant 0 : i32
    return %c0_i32, %c0_i32_0 : i32, i32
  }
}

module attributes {stable_mosaic.version = 11 : i64} {
  func.func @_bn_lrelu_kernel(%arg0: i32, %arg1: memref<64x128xf32, #tpu.memory_space<vmem>>, %arg2: memref<1x128xf32, #tpu.memory_space<vmem>>, %arg3: memref<1x128xf32, #tpu.memory_space<vmem>>, %arg4: memref<64x128xf32, #tpu.memory_space<vmem>>) attributes {dimension_semantics = [#tpu.dimension_semantics<parallel>], iteration_bounds = array<i64: 2>, scalar_prefetch = 0 : i64, scratch_operands = 0 : i64, tpu.core_type = #tpu.core_type<tc>, window_params = [{transform_indices = @transform_0, window_bounds = array<i64: 64, 128>}, {pipeline_mode = #tpu.pipeline_mode<synchronous>, transform_indices = @transform_1, window_bounds = array<i64: 1, 128>}, {pipeline_mode = #tpu.pipeline_mode<synchronous>, transform_indices = @transform_2, window_bounds = array<i64: 1, 128>}, {transform_indices = @transform_3, window_bounds = array<i64: 64, 128>}]} {
    %c0 = arith.constant 0 : index
    %c0_0 = arith.constant 0 : index
    %0 = vector.load %arg1[%c0, %c0_0] : memref<64x128xf32, #tpu.memory_space<vmem>>, vector<64x128xf32>
    %c0_1 = arith.constant 0 : index
    %c0_2 = arith.constant 0 : index
    %1 = vector.load %arg2[%c0_1, %c0_2] : memref<1x128xf32, #tpu.memory_space<vmem>>, vector<1x128xf32>
    %2 = vector.broadcast %1 : vector<1x128xf32> to vector<64x128xf32>
    %3 = arith.mulf %0, %2 : vector<64x128xf32>
    %c0_3 = arith.constant 0 : index
    %c0_4 = arith.constant 0 : index
    %4 = vector.load %arg3[%c0_3, %c0_4] : memref<1x128xf32, #tpu.memory_space<vmem>>, vector<1x128xf32>
    %5 = vector.broadcast %4 : vector<1x128xf32> to vector<64x128xf32>
    %6 = arith.addf %3, %5 : vector<64x128xf32>
    %cst = arith.constant 2.000000e-01 : f32
    %7 = vector.broadcast %cst : f32 to vector<64x128xf32>
    %8 = arith.mulf %7, %6 : vector<64x128xf32>
    %9 = arith.maximumf %6, %8 : vector<64x128xf32>
    %c0_5 = arith.constant 0 : index
    %c0_6 = arith.constant 0 : index
    %10 = vector.load %arg4[%c0_5, %c0_6] : memref<64x128xf32, #tpu.memory_space<vmem>>, vector<64x128xf32>
    tpu.vector_store %arg4[%c0_5, %c0_6], %9 {strides = array<i32>} : memref<64x128xf32, #tpu.memory_space<vmem>>, vector<64x128xf32>,
    return
  }
  func.func @transform_0(%arg0: i32) -> (i32, i32) {
    %c0_i32 = arith.constant 0 : i32
    %c0_i32_0 = arith.constant 0 : i32
    return %arg0, %c0_i32 : i32, i32
  }
  func.func @transform_1(%arg0: i32) -> (i32, i32) {
    %c0_i32 = arith.constant 0 : i32
    %c0_i32_0 = arith.constant 0 : i32
    %c0_i32_1 = arith.constant 0 : i32
    return %c0_i32, %c0_i32_0 : i32, i32
  }
  func.func @transform_2(%arg0: i32) -> (i32, i32) {
    %c0_i32 = arith.constant 0 : i32
    %c0_i32_0 = arith.constant 0 : i32
    %c0_i32_1 = arith.constant 0 : i32
    return %c0_i32, %c0_i32_0 : i32, i32
  }
  func.func @transform_3(%arg0: i32) -> (i32, i32) {
    %c0_i32 = arith.constant 0 : i32
    %c0_i32_0 = arith.constant 0 : i32
    return %arg0, %c0_i32 : i32, i32
  }
}

</mosaic_0001>

<llo_original>
// kernel: basic_block_forward.3
$region0: #{basic_block_forward.3}
  #allocation0 [shape = 'u32[]', space=smem, size = 0x4, offset = 0x4, fixed_abs, tag = 'smem constant byte address 0x4 - core index']
  #allocation1 [shape = 'u32[144,128]{1,0:T(1,128)}', space=vmem, size = 0x12000, scoped, tag = 'internal scratch']
  %s0 = inlined_call_operand.vmem [shape: f32[128,128], index: 0, kind: input, shape index: {}, may-alias: {0,3}]
  %s1 = inlined_call_operand.vmem [shape: f32[1,128], index: 1, kind: input, shape index: {}]
  %s2 = inlined_call_operand.vmem [shape: f32[1,128], index: 2, kind: input, shape index: {}]
  %s3 = inlined_call_operand.vmem [shape: f32[128,128], index: 3, kind: output, shape index: {}, may-alias: {0,3}]
  %s4 = sld [smem:[#allocation0]]
  $region45: #{basic_block_forward.3} parent=0
    _
  %s6 = ssub.s32 1, %s4
  %s7 = scalar_select 0, %s6, %s4
  loop: start=0, step=1, limit=4
  $region2: #{basic_block_forward.3} parent=0 // loop_pre_header
    _
  $region3: #{basic_block_forward.3} parent=0 // loop_header
    %s9 = sphi 0, %s13
    %p10 = scmp.ge.s32.totalorder %s9, 4
    %s19 = sphi 0, %s21
    %s22 = sphi 0, %s19
    %s23 = sphi 0, %s22
    %s39 = sphi 0, %s23
    %s43 = sphi 0, %s43
    %s45 = sphi 0, %s43
    %s46 = sphi 0, %s45
    %s60 = sphi 0, %s46
    %s64 = sphi 0, %s64
    %s66 = sphi 0, %s64
    %s67 = sphi 0, %s66
    %s81 = sphi 0, %s67
    %s87 = sphi 0, %s89
    %s90 = sphi 0, %s87
    %s91 = sphi 0, %s90
    %s107 = sphi 0, %s91
  $region4: #{basic_block_forward.3} parent=0 // loop_header_branch
    %12 = sbr.rel (%p10) target = $region8
  $region5: #{basic_block_forward.3} parent=0 // loop_body
    %s14 = ssub.s32 %s9, 1
    %s15 = ssub.s32 %s9, 2
    %s16 = sadd.s32 %s9, 1
    %s17 = ssub.s32 %s9, %s16
    %p18 = scmp.eq.s32.totalorder %s17, 0
    %s20 = sadd.s32 %s19, 1
    %s21 = scalar_select %p18, %s19, %s20
    %p24 = pneg %p18
    %p25 = scmp.eq.s32.totalorder %s9, 1
    %p26 = por %p24, %p25
    %p27 = scmp.ne.s32.totalorder %s19, %s22
    %p28 = scmp.eq.s32.totalorder %s9, 0
    %p29 = por %p27, %p28
    %p30 = scmp.ne.s32.totalorder %s19, %s22
    %p31 = scmp.eq.s32.totalorder %s14, 1
    %p32 = por %p30, %p31
    %p33 = scmp.ne.s32.totalorder %s22, %s23
    %p34 = scmp.eq.s32.totalorder %s14, 0
    %p35 = por %p33, %p34
    %p36 = scmp.ne.s32.totalorder %s22, %s23
    %p37 = scmp.eq.s32.totalorder %s15, 1
    %p38 = por %p36, %p37
    %p40 = scmp.ne.s32.totalorder %s23, %s39
    %p41 = scmp.eq.s32.totalorder %s15, 0
    %p42 = por %p40, %p41
    %s44 = sadd.s32 %s43, 1
    %p47 = scmp.eq.s32.totalorder %s9, 1
    %p48 = scmp.ne.s32.totalorder %s43, %s45
    %p49 = scmp.eq.s32.totalorder %s9, 0
    %p50 = por %p48, %p49
    %p51 = scmp.ne.s32.totalorder %s43, %s45
    %p52 = scmp.eq.s32.totalorder %s14, 1
    %p53 = por %p51, %p52
    %p54 = scmp.ne.s32.totalorder %s45, %s46
    %p55 = scmp.eq.s32.totalorder %s14, 0
    %p56 = por %p54, %p55
    %p57 = scmp.ne.s32.totalorder %s45, %s46
    %p58 = scmp.eq.s32.totalorder %s15, 1
    %p59 = por %p57, %p58
    %p61 = scmp.ne.s32.totalorder %s46, %s60
    %p62 = scmp.eq.s32.totalorder %s15, 0
    %p63 = por %p61, %p62
    %s65 = sadd.s32 %s64, 1
    %p68 = scmp.eq.s32.totalorder %s9, 1
    %p69 = scmp.ne.s32.totalorder %s64, %s66
    %p70 = scmp.eq.s32.totalorder %s9, 0
    %p71 = por %p69, %p70
    %p72 = scmp.ne.s32.totalorder %s64, %s66
    %p73 = scmp.eq.s32.totalorder %s14, 1
    %p74 = por %p72, %p73
    %p75 = scmp.ne.s32.totalorder %s66, %s67
    %p76 = scmp.eq.s32.totalorder %s14, 0
    %p77 = por %p75, %p76
    %p78 = scmp.ne.s32.totalorder %s66, %s67
    %p79 = scmp.eq.s32.totalorder %s15, 1
    %p80 = por %p78, %p79
    %p82 = scmp.ne.s32.totalorder %s67, %s81
    %p83 = scmp.eq.s32.totalorder %s15, 0
    %p84 = por %p82, %p83
    %s85 = ssub.s32 %s9, %s16
    %p86 = scmp.eq.s32.totalorder %s85, 0
    %s88 = sadd.s32 %s87, 1
    %s89 = scalar_select %p86, %s87, %s88
    %p92 = pneg %p86
    %p93 = scmp.eq.s32.totalorder %s9, 1
    %p94 = por %p92, %p93
    %p95 = scmp.ne.s32.totalorder %s87, %s90
    %p96 = scmp.eq.s32.totalorder %s9, 0
    %p97 = por %p95, %p96
    %p98 = scmp.ne.s32.totalorder %s87, %s90
    %p99 = scmp.eq.s32.totalorder %s14, 1
    %p100 = por %p98, %p99
    %p101 = scmp.ne.s32.totalorder %s90, %s91
    %p102 = scmp.eq.s32.totalorder %s14, 0
    %p103 = por %p101, %p102
    %p104 = scmp.ne.s32.totalorder %s90, %s91
    %p105 = scmp.eq.s32.totalorder %s15, 1
    %p106 = por %p104, %p105
    %p108 = scmp.ne.s32.totalorder %s91, %s107
    %p109 = scmp.eq.s32.totalorder %s15, 0
    %p110 = por %p108, %p109
    %p111 = scmp.le.s32.totalorder 1, %s9
    %p112 = scmp.lt.s32.totalorder %s9, 3
    %p113 = pnand %p111, %p112
    %p114 = pneg %p113
    // Predicated region
    $region9: #{basic_block_forward.3} parent=5 // pred_check
      _
    $region10: #{basic_block_forward.3} parent=5 // pred_check_branch
      %116 = sbr.rel (%p113) target = $region12
    $region11: #{basic_block_forward.3} parent=5 // pred_region
      %s117 = ssub.s32 %s9, 1
      // Predicated region
      $region13: #{basic_block_forward.3} parent=11 // pred_check
        %p118 = pneg %p56
      $region14: #{basic_block_forward.3} parent=11 // pred_check_branch
        %120 = sbr.rel (%p118) target = $region16
      $region15: #{basic_block_forward.3} parent=11 // pred_region
        _
      $region16: #{basic_block_forward.3} parent=11 // pred_fallthru
        _
      // Predicated region
      $region17: #{basic_block_forward.3} parent=11 // pred_check
        %p121 = pneg %p77
      $region18: #{basic_block_forward.3} parent=11 // pred_check_branch
        %123 = sbr.rel (%p121) target = $region20
      $region19: #{basic_block_forward.3} parent=11 // pred_region
        _
      $region20: #{basic_block_forward.3} parent=11 // pred_fallthru
        _
    $region12: #{basic_block_forward.3} parent=5 // pred_fallthru
      _
    %p124 = scmp.lt.s32.totalorder %s9, 2
    // Predicated region
    $region21: #{basic_block_forward.3} parent=5 // pred_check
      %p125 = pneg %p124
    $region22: #{basic_block_forward.3} parent=5 // pred_check_branch
      %127 = sbr.rel (%p125) target = $region24
    $region23: #{basic_block_forward.3} parent=5 // pred_region
      // Predicated region
      $region25: #{basic_block_forward.3} parent=23 // pred_check
        %p128 = pneg %p29
      $region26: #{basic_block_forward.3} parent=23 // pred_check_branch
        %130 = sbr.rel (%p128) target = $region28
      $region27: #{basic_block_forward.3} parent=23 // pred_region
        %s131 = smul.u32 8, %s9
        %p132 = scmp.lt.s32.totalorder %s131, 15
        %s133 = scalar_select %p132, %s131, 15
        %s134 = smul.addr %s133, 8
        %s135 = scalar_lea.vmem %s0, %s134
        %s136 = smul.u32 8, %s9
      $region28: #{basic_block_forward.3} parent=23 // pred_fallthru
        _
    $region24: #{basic_block_forward.3} parent=5 // pred_fallthru
      _
    %p137 = scmp.le.s32.totalorder 1, %s9
    %p138 = scmp.lt.s32.totalorder %s9, 3
    %p139 = pnand %p137, %p138
    %p140 = pneg %p139
    // Predicated region
    $region29: #{basic_block_forward.3} parent=5 // pred_check
      _
    $region30: #{basic_block_forward.3} parent=5 // pred_check_branch
      %142 = sbr.rel (%p139) target = $region32
    $region31: #{basic_block_forward.3} parent=5 // pred_region
      %s143 = ssub.s32 %s9, 1
      %s144 = smul.u32 8, %s14
      %p145 = scmp.lt.s32.totalorder %s144, 15
      %s146 = scalar_select %p145, %s144, 15
      %s147 = smul.addr %s146, 8
      %s148 = scalar_lea.vmem %s0, %s147
      %p149 = pneg %p35
      %p150 = pneg %p32
      %p151 = pneg %p56
      %p152 = pneg %p53
      %p153 = pneg %p77
      %p154 = pneg %p74
      %p155 = pneg %p103
      %p156 = pneg %p100
      %s157 = smul.u32 8, %s14
      %p158 = scmp.lt.s32.totalorder %s157, 15
      %s159 = scalar_select %p158, %s157, 15
      %s160 = smul.addr %s159, 8
      %s161 = scalar_lea.vmem %s3, %s160
      %s162 = smul.u32 8, %s14
      %p163 = scmp.lt.s32.totalorder %s162, 15
      %s164 = scalar_select %p163, %s162, 15
      %s165 = smul.addr %s164, 8
      %s166 = scalar_lea.vmem %s0, %s165
      %s167 = smul.u32 8, %s14
      %s168 = smul.u32 8, %s14
      %p169 = scmp.lt.s32.totalorder %s168, 15
      %s170 = scalar_select %p169, %s168, 15
      %s171 = smul.addr %s170, 8
      %s172 = scalar_lea.vmem %s3, %s171
      %s173 = smul.u32 8, %s14
      %v174 = vld [vmem:[%s166] sm:$0xff]
      %v175 = vld [vmem:[%s166 + $0x8] sm:$0xff]
      %v176 = vld [vmem:[%s166 + $0x10] sm:$0xff]
      %v177 = vld [vmem:[%s166 + $0x18] sm:$0xff]
      %v178 = vld [vmem:[%s166 + $0x20] sm:$0xff]
      %v179 = vld [vmem:[%s166 + $0x28] sm:$0xff]
      %v180 = vld [vmem:[%s166 + $0x30] sm:$0xff]
      %v181 = vld [vmem:[%s166 + $0x38] sm:$0xff]
      %v182 = vld [vmem:[%s1] sm:$0x1]
      %v184 = vlaneseq
      %v185 = vshrl.u32 %v184, 7
      %v186 = vsub.s32 0, %v185
      %v187 = vrot.slane %v182, %v186
      %v189 = vmul.f32 %v174, %v187
      %v190 = vmul.f32 %v175, %v187
      %v191 = vmul.f32 %v176, %v187
      %v192 = vmul.f32 %v177, %v187
      %v193 = vmul.f32 %v178, %v187
      %v194 = vmul.f32 %v179, %v187
      %v195 = vmul.f32 %v180, %v187
      %v196 = vmul.f32 %v181, %v187
      %v197 = vld [vmem:[%s2] sm:$0x1]
      %v199 = vlaneseq
      %v200 = vshrl.u32 %v199, 7
      %v201 = vsub.s32 0, %v200
      %v202 = vrot.slane %v197, %v201
      %v204 = vadd.f32 %v189, %v202
      %v205 = vadd.f32 %v190, %v202
      %v206 = vadd.f32 %v191, %v202
      %v207 = vadd.f32 %v192, %v202
      %v208 = vadd.f32 %v193, %v202
      %v209 = vadd.f32 %v194, %v202
      %v210 = vadd.f32 %v195, %v202
      %v211 = vadd.f32 %v196, %v202
      %v212 = vmul.f32 %v204, 0.2
      %v213 = vmul.f32 %v205, 0.2
      %v214 = vmul.f32 %v206, 0.2
      %v215 = vmul.f32 %v207, 0.2
      %v216 = vmul.f32 %v208, 0.2
      %v217 = vmul.f32 %v209, 0.2
      %v218 = vmul.f32 %v210, 0.2
      %v219 = vmul.f32 %v211, 0.2
      %v220 = vmax.f32 %v204, %v212
      %v221 = vmax.f32 %v205, %v213
      %v222 = vmax.f32 %v206, %v214
      %v223 = vmax.f32 %v207, %v215
      %v224 = vmax.f32 %v208, %v216
      %v225 = vmax.f32 %v209, %v217
      %v226 = vmax.f32 %v210, %v218
      %v227 = vmax.f32 %v211, %v219
      %228 = vst [vmem:[%s172] sm:$0xff] %v220
      %229 = vst [vmem:[%s172 + $0x8] sm:$0xff] %v221
      %230 = vst [vmem:[%s172 + $0x10] sm:$0xff] %v222
      %231 = vst [vmem:[%s172 + $0x18] sm:$0xff] %v223
      %232 = vst [vmem:[%s172 + $0x20] sm:$0xff] %v224
      %233 = vst [vmem:[%s172 + $0x28] sm:$0xff] %v225
      %234 = vst [vmem:[%s172 + $0x30] sm:$0xff] %v226
      %235 = vst [vmem:[%s172 + $0x38] sm:$0xff] %v227
      %s236 = smul.u32 8, %s14
      %p237 = scmp.lt.s32.totalorder %s236, 15
      %s238 = scalar_select %p237, %s236, 15
      %s239 = smul.addr %s238, 8
      %s240 = scalar_lea.vmem %s3, %s239
      // Predicated region
      $region33: #{basic_block_forward.3} parent=31 // pred_check
        %p241 = pneg %p100
      $region34: #{basic_block_forward.3} parent=31 // pred_check_branch
        %243 = sbr.rel (%p241) target = $region36
      $region35: #{basic_block_forward.3} parent=31 // pred_region
        %s244 = smul.u32 8, %s14
      $region36: #{basic_block_forward.3} parent=31 // pred_fallthru
        _
    $region32: #{basic_block_forward.3} parent=5 // pred_fallthru
      _
    %p245 = scmp.le.s32.totalorder 2, %s9
    // Predicated region
    $region37: #{basic_block_forward.3} parent=5 // pred_check
      %p246 = pneg %p245
    $region38: #{basic_block_forward.3} parent=5 // pred_check_branch
      %248 = sbr.rel (%p246) target = $region40
    $region39: #{basic_block_forward.3} parent=5 // pred_region
      %s249 = ssub.s32 %s9, 2
      // Predicated region
      $region41: #{basic_block_forward.3} parent=39 // pred_check
        %p250 = pneg %p106
      $region42: #{basic_block_forward.3} parent=39 // pred_check_branch
        %252 = sbr.rel (%p250) target = $region44
      $region43: #{basic_block_forward.3} parent=39 // pred_region
        %s253 = smul.u32 8, %s15
        %p254 = scmp.lt.s32.totalorder %s253, 15
        %s255 = scalar_select %p254, %s253, 15
        %s256 = smul.addr %s255, 8
        %s257 = scalar_lea.vmem %s3, %s256
      $region44: #{basic_block_forward.3} parent=39 // pred_fallthru
        _
    $region40: #{basic_block_forward.3} parent=5 // pred_fallthru
      _
  $region6: #{basic_block_forward.3} parent=0 // loop_footer
    %s13 = sadd.s32 1, %s9
  $region7: #{basic_block_forward.3} parent=0 // loop_footer_branch
    %8 = sbr.rel target = $region3
  $region8: #{basic_block_forward.3} parent=0 // loop_exit
    _

// kernel: basic_block_forward.2
$region0: #{basic_block_forward.2}
  #allocation0 [shape = 'u32[]', space=smem, size = 0x4, offset = 0x4, fixed_abs, tag = 'smem constant byte address 0x4 - core index']
  #allocation1 [shape = 'u32[144,128]{1,0:T(1,128)}', space=vmem, size = 0x12000, scoped, tag = 'internal scratch']
  %s0 = inlined_call_operand.vmem [shape: bf16[128,128], index: 0, kind: input, shape index: {}]
  %s1 = inlined_call_operand.vmem [shape: bf16[128,128], index: 1, kind: input, shape index: {}]
  %s2 = inlined_call_operand.vmem [shape: f32[2,1,128], index: 2, kind: input, shape index: {}]
  %s3 = inlined_call_operand.vmem [shape: f32[128,128], index: 3, kind: output, shape index: {0}]
  %s4 = inlined_call_operand.vmem [shape: f32[1,128], index: 4, kind: output, shape index: {1}]
  %s5 = inlined_call_operand.vmem [shape: f32[1,128], index: 5, kind: output, shape index: {2}]
  %6 = xla_tuple %s3, %s4, %s5
  %s7 = sld [smem:[#allocation0]]
  $region65: #{basic_block_forward.2} parent=0
    _
  %s9 = ssub.s32 1, %s7
  %s10 = scalar_select 0, %s9, %s7
  loop: start=0, step=1, limit=4
  $region2: #{basic_block_forward.2} parent=0 // loop_pre_header
    _
  $region3: #{basic_block_forward.2} parent=0 // loop_header
    %s12 = sphi 0, %s16
    %p13 = scmp.ge.s32.totalorder %s12, 4
    %s22 = sphi 0, %s24
    %s25 = sphi 0, %s22
    %s26 = sphi 0, %s25
    %s42 = sphi 0, %s26
    %s46 = sphi 0, %s46
    %s48 = sphi 0, %s46
    %s49 = sphi 0, %s48
    %s63 = sphi 0, %s49
    %s69 = sphi 0, %s71
    %s72 = sphi 0, %s69
    %s73 = sphi 0, %s72
    %s89 = sphi 0, %s73
    %s95 = sphi 0, %s97
    %s98 = sphi 0, %s95
    %s99 = sphi 0, %s98
    %s115 = sphi 0, %s99
    %s119 = sphi 0, %s119
    %s121 = sphi 0, %s119
    %s122 = sphi 0, %s121
    %s136 = sphi 0, %s122
    %s140 = sphi 0, %s140
    %s142 = sphi 0, %s140
    %s143 = sphi 0, %s142
    %s157 = sphi 0, %s143
  $region4: #{basic_block_forward.2} parent=0 // loop_header_branch
    %15 = sbr.rel (%p13) target = $region8
  $region5: #{basic_block_forward.2} parent=0 // loop_body
    %s17 = ssub.s32 %s12, 1
    %s18 = ssub.s32 %s12, 2
    %s19 = sadd.s32 %s12, 1
    %s20 = ssub.s32 %s12, %s19
    %p21 = scmp.eq.s32.totalorder %s20, 0
    %s23 = sadd.s32 %s22, 1
    %s24 = scalar_select %p21, %s22, %s23
    %p27 = pneg %p21
    %p28 = scmp.eq.s32.totalorder %s12, 1
    %p29 = por %p27, %p28
    %p30 = scmp.ne.s32.totalorder %s22, %s25
    %p31 = scmp.eq.s32.totalorder %s12, 0
    %p32 = por %p30, %p31
    %p33 = scmp.ne.s32.totalorder %s22, %s25
    %p34 = scmp.eq.s32.totalorder %s17, 1
    %p35 = por %p33, %p34
    %p36 = scmp.ne.s32.totalorder %s25, %s26
    %p37 = scmp.eq.s32.totalorder %s17, 0
    %p38 = por %p36, %p37
    %p39 = scmp.ne.s32.totalorder %s25, %s26
    %p40 = scmp.eq.s32.totalorder %s18, 1
    %p41 = por %p39, %p40
    %p43 = scmp.ne.s32.totalorder %s26, %s42
    %p44 = scmp.eq.s32.totalorder %s18, 0
    %p45 = por %p43, %p44
    %s47 = sadd.s32 %s46, 1
    %p50 = scmp.eq.s32.totalorder %s12, 1
    %p51 = scmp.ne.s32.totalorder %s46, %s48
    %p52 = scmp.eq.s32.totalorder %s12, 0
    %p53 = por %p51, %p52
    %p54 = scmp.ne.s32.totalorder %s46, %s48
    %p55 = scmp.eq.s32.totalorder %s17, 1
    %p56 = por %p54, %p55
    %p57 = scmp.ne.s32.totalorder %s48, %s49
    %p58 = scmp.eq.s32.totalorder %s17, 0
    %p59 = por %p57, %p58
    %p60 = scmp.ne.s32.totalorder %s48, %s49
    %p61 = scmp.eq.s32.totalorder %s18, 1
    %p62 = por %p60, %p61
    %p64 = scmp.ne.s32.totalorder %s49, %s63
    %p65 = scmp.eq.s32.totalorder %s18, 0
    %p66 = por %p64, %p65
    %s67 = ssub.s32 %s12, %s19
    %p68 = scmp.eq.s32.totalorder %s67, 0
    %s70 = sadd.s32 %s69, 1
    %s71 = scalar_select %p68, %s69, %s70
    %p74 = pneg %p68
    %p75 = scmp.eq.s32.totalorder %s12, 1
    %p76 = por %p74, %p75
    %p77 = scmp.ne.s32.totalorder %s69, %s72
    %p78 = scmp.eq.s32.totalorder %s12, 0
    %p79 = por %p77, %p78
    %p80 = scmp.ne.s32.totalorder %s69, %s72
    %p81 = scmp.eq.s32.totalorder %s17, 1
    %p82 = por %p80, %p81
    %p83 = scmp.ne.s32.totalorder %s72, %s73
    %p84 = scmp.eq.s32.totalorder %s17, 0
    %p85 = por %p83, %p84
    %p86 = scmp.ne.s32.totalorder %s72, %s73
    %p87 = scmp.eq.s32.totalorder %s18, 1
    %p88 = por %p86, %p87
    %p90 = scmp.ne.s32.totalorder %s73, %s89
    %p91 = scmp.eq.s32.totalorder %s18, 0
    %p92 = por %p90, %p91
    %s93 = ssub.s32 %s12, %s19
    %p94 = scmp.eq.s32.totalorder %s93, 0
    %s96 = sadd.s32 %s95, 1
    %s97 = scalar_select %p94, %s95, %s96
    %p100 = pneg %p94
    %p101 = scmp.eq.s32.totalorder %s12, 1
    %p102 = por %p100, %p101
    %p103 = scmp.ne.s32.totalorder %s95, %s98
    %p104 = scmp.eq.s32.totalorder %s12, 0
    %p105 = por %p103, %p104
    %p106 = scmp.ne.s32.totalorder %s95, %s98
    %p107 = scmp.eq.s32.totalorder %s17, 1
    %p108 = por %p106, %p107
    %p109 = scmp.ne.s32.totalorder %s98, %s99
    %p110 = scmp.eq.s32.totalorder %s17, 0
    %p111 = por %p109, %p110
    %p112 = scmp.ne.s32.totalorder %s98, %s99
    %p113 = scmp.eq.s32.totalorder %s18, 1
    %p114 = por %p112, %p113
    %p116 = scmp.ne.s32.totalorder %s99, %s115
    %p117 = scmp.eq.s32.totalorder %s18, 0
    %p118 = por %p116, %p117
    %s120 = sadd.s32 %s119, 1
    %p123 = scmp.eq.s32.totalorder %s12, 1
    %p124 = scmp.ne.s32.totalorder %s119, %s121
    %p125 = scmp.eq.s32.totalorder %s12, 0
    %p126 = por %p124, %p125
    %p127 = scmp.ne.s32.totalorder %s119, %s121
    %p128 = scmp.eq.s32.totalorder %s17, 1
    %p129 = por %p127, %p128
    %p130 = scmp.ne.s32.totalorder %s121, %s122
    %p131 = scmp.eq.s32.totalorder %s17, 0
    %p132 = por %p130, %p131
    %p133 = scmp.ne.s32.totalorder %s121, %s122
    %p134 = scmp.eq.s32.totalorder %s18, 1
    %p135 = por %p133, %p134
    %p137 = scmp.ne.s32.totalorder %s122, %s136
    %p138 = scmp.eq.s32.totalorder %s18, 0
    %p139 = por %p137, %p138
    %s141 = sadd.s32 %s140, 1
    %p144 = scmp.eq.s32.totalorder %s12, 1
    %p145 = scmp.ne.s32.totalorder %s140, %s142
    %p146 = scmp.eq.s32.totalorder %s12, 0
    %p147 = por %p145, %p146
    %p148 = scmp.ne.s32.totalorder %s140, %s142
    %p149 = scmp.eq.s32.totalorder %s17, 1
    %p150 = por %p148, %p149
    %p151 = scmp.ne.s32.totalorder %s142, %s143
    %p152 = scmp.eq.s32.totalorder %s17, 0
    %p153 = por %p151, %p152
    %p154 = scmp.ne.s32.totalorder %s142, %s143
    %p155 = scmp.eq.s32.totalorder %s18, 1
    %p156 = por %p154, %p155
    %p158 = scmp.ne.s32.totalorder %s143, %s157
    %p159 = scmp.eq.s32.totalorder %s18, 0
    %p160 = por %p158, %p159
    %p161 = scmp.le.s32.totalorder 1, %s12
    %p162 = scmp.lt.s32.totalorder %s12, 3
    %p163 = pnand %p161, %p162
    %p164 = pneg %p163
    // Predicated region
    $region9: #{basic_block_forward.2} parent=5 // pred_check
      _
    $region10: #{basic_block_forward.2} parent=5 // pred_check_branch
      %166 = sbr.rel (%p163) target = $region12
    $region11: #{basic_block_forward.2} parent=5 // pred_region
      %s167 = ssub.s32 %s12, 1
      // Predicated region
      $region13: #{basic_block_forward.2} parent=11 // pred_check
        %p168 = pneg %p59
      $region14: #{basic_block_forward.2} parent=11 // pred_check_branch
        %170 = sbr.rel (%p168) target = $region16
      $region15: #{basic_block_forward.2} parent=11 // pred_region
        _
      $region16: #{basic_block_forward.2} parent=11 // pred_fallthru
        _
    $region12: #{basic_block_forward.2} parent=5 // pred_fallthru
      _
    %p171 = scmp.lt.s32.totalorder %s12, 2
    // Predicated region
    $region17: #{basic_block_forward.2} parent=5 // pred_check
      %p172 = pneg %p171
    $region18: #{basic_block_forward.2} parent=5 // pred_check_branch
      %174 = sbr.rel (%p172) target = $region20
    $region19: #{basic_block_forward.2} parent=5 // pred_region
      // Predicated region
      $region21: #{basic_block_forward.2} parent=19 // pred_check
        %p175 = pneg %p32
      $region22: #{basic_block_forward.2} parent=19 // pred_check_branch
        %177 = sbr.rel (%p175) target = $region24
      $region23: #{basic_block_forward.2} parent=19 // pred_region
        %s178 = smul.u32 8, %s12
        %p179 = scmp.lt.s32.totalorder %s178, 15
        %s180 = scalar_select %p179, %s178, 15
        %s181 = smul.addr %s180, 4
        %s182 = scalar_lea.vmem %s0, %s181
        %s183 = smul.u32 8, %s12
      $region24: #{basic_block_forward.2} parent=19 // pred_fallthru
        _
      // Predicated region
      $region25: #{basic_block_forward.2} parent=19 // pred_check
        %p184 = pneg %p79
      $region26: #{basic_block_forward.2} parent=19 // pred_check_branch
        %186 = sbr.rel (%p184) target = $region28
      $region27: #{basic_block_forward.2} parent=19 // pred_region
        %p187 = scmp.lt.s32.totalorder %s12, 1
        %s188 = scalar_select %p187, %s12, 1
        %s189 = scalar_lea.vmem %s2, %s188
      $region28: #{basic_block_forward.2} parent=19 // pred_fallthru
        _
    $region20: #{basic_block_forward.2} parent=5 // pred_fallthru
      _
    %p190 = scmp.le.s32.totalorder 1, %s12
    %p191 = scmp.lt.s32.totalorder %s12, 3
    %p192 = pnand %p190, %p191
    %p193 = pneg %p192
    // Predicated region
    $region29: #{basic_block_forward.2} parent=5 // pred_check
      _
    $region30: #{basic_block_forward.2} parent=5 // pred_check_branch
      %195 = sbr.rel (%p192) target = $region32
    $region31: #{basic_block_forward.2} parent=5 // pred_region
      %s196 = ssub.s32 %s12, 1
      %s197 = smul.u32 8, %s17
      %p198 = scmp.lt.s32.totalorder %s197, 15
      %s199 = scalar_select %p198, %s197, 15
      %s200 = smul.addr %s199, 4
      %s201 = scalar_lea.vmem %s0, %s200
      %p202 = pneg %p38
      %p203 = pneg %p35
      %p204 = pneg %p59
      %p205 = pneg %p56
      %p206 = scmp.lt.s32.totalorder %s17, 1
      %s207 = scalar_select %p206, %s17, 1
      %s208 = scalar_lea.vmem %s2, %s207
      %p209 = pneg %p85
      %p210 = pneg %p82
      %p211 = pneg %p111
      %p212 = pneg %p108
      %s213 = smul.u32 8, %s17
      %p214 = scmp.lt.s32.totalorder %s213, 15
      %s215 = scalar_select %p214, %s213, 15
      %s216 = smul.addr %s215, 8
      %s217 = scalar_lea.vmem %s3, %s216
      %p218 = pneg %p132
      %p219 = pneg %p129
      %p220 = pneg %p153
      %p221 = pneg %p150
      %s222 = smul.u32 8, %s17
      %p223 = scmp.lt.s32.totalorder %s222, 15
      %s224 = scalar_select %p223, %s222, 15
      %s225 = smul.addr %s224, 4
      %s226 = scalar_lea.vmem %s0, %s225
      %s227 = smul.u32 8, %s17
      %p228 = scmp.lt.s32.totalorder %s17, 1
      %s229 = scalar_select %p228, %s17, 1
      %s230 = scalar_lea.vmem %s2, %s229
      %s231 = smul.u32 8, %s17
      %p232 = scmp.lt.s32.totalorder %s231, 15
      %s233 = scalar_select %p232, %s231, 15
      %s234 = smul.addr %s233, 8
      %s235 = scalar_lea.vmem %s3, %s234
      %s236 = smul.u32 8, %s17
      %v238 = vld [vmem:[%s226] sm:$0xf]
      %v239 = vld [vmem:[%s226 + $0x4] sm:$0xf]
      %v240 = vld [vmem:[%s226 + $0x8] sm:$0xf]
      %v241 = vld [vmem:[%s226 + $0xc] sm:$0xf]
      %v242 = vld [vmem:[%s226 + $0x10] sm:$0xf]
      %v243 = vld [vmem:[%s226 + $0x14] sm:$0xf]
      %v244 = vld [vmem:[%s226 + $0x18] sm:$0xf]
      %v245 = vld [vmem:[%s226 + $0x1c] sm:$0xf]
      %v246 = vld [vmem:[%s1] sm:$0xf]
      %v247 = vld [vmem:[%s1 + $0x4] sm:$0xf]
      %v248 = vld [vmem:[%s1 + $0x8] sm:$0xf]
      %v249 = vld [vmem:[%s1 + $0xc] sm:$0xf]
      %v250 = vld [vmem:[%s1 + $0x10] sm:$0xf]
      %v251 = vld [vmem:[%s1 + $0x14] sm:$0xf]
      %v252 = vld [vmem:[%s1 + $0x18] sm:$0xf]
      %v253 = vld [vmem:[%s1 + $0x1c] sm:$0xf]
      %v254 = vld [vmem:[%s1 + $0x20] sm:$0xf]
      %v255 = vld [vmem:[%s1 + $0x24] sm:$0xf]
      %v256 = vld [vmem:[%s1 + $0x28] sm:$0xf]
      %v257 = vld [vmem:[%s1 + $0x2c] sm:$0xf]
      %v258 = vld [vmem:[%s1 + $0x30] sm:$0xf]
      %v259 = vld [vmem:[%s1 + $0x34] sm:$0xf]
      %v260 = vld [vmem:[%s1 + $0x38] sm:$0xf]
      %v261 = vld [vmem:[%s1 + $0x3c] sm:$0xf]
      %v270 = vunpack.c.l.b16 %v238
      %v271 = vunpack.c.l.b16 %v239
      %v272 = vunpack.c.l.b16 %v240
      %v273 = vunpack.c.l.b16 %v241
      %v274 = vunpack.c.l.b16 %v242
      %v275 = vunpack.c.l.b16 %v243
      %v276 = vunpack.c.l.b16 %v244
      %v277 = vunpack.c.l.b16 %v245
      %v278 = vpack.c.b16 %v271, %v270
      %v279 = vpack.c.b16 %v273, %v272
      %v280 = vpack.c.b16 %v275, %v274
      %v281 = vpack.c.b16 %v277, %v276
      %v302 = vunpack.c.l.b16 %v246
      %v303 = vunpack.c.l.b16 %v247
      %v304 = vunpack.c.l.b16 %v248
      %v305 = vunpack.c.l.b16 %v249
      %v306 = vunpack.c.l.b16 %v250
      %v307 = vunpack.c.l.b16 %v251
      %v308 = vunpack.c.l.b16 %v252
      %v309 = vunpack.c.l.b16 %v253
      %v310 = vunpack.c.l.b16 %v254
      %v311 = vunpack.c.l.b16 %v255
      %v312 = vunpack.c.l.b16 %v256
      %v313 = vunpack.c.l.b16 %v257
      %v314 = vunpack.c.l.b16 %v258
      %v315 = vunpack.c.l.b16 %v259
      %v316 = vunpack.c.l.b16 %v260
      %v317 = vunpack.c.l.b16 %v261
      %v318 = vpack.c.b16 %v303, %v302
      %v319 = vpack.c.b16 %v305, %v304
      %v320 = vpack.c.b16 %v307, %v306
      %v321 = vpack.c.b16 %v309, %v308
      %v322 = vpack.c.b16 %v311, %v310
      %v323 = vpack.c.b16 %v313, %v312
      %v324 = vpack.c.b16 %v315, %v314
      %v325 = vpack.c.b16 %v317, %v316
      %334 = vmatprep.subr.bf16.mxu0 0
      %335 = vmatpush1.bf16.msra.mxu0 %v318
      %336 = vmatprep.subr.bf16.mxu0 0
      %337 = vmatpush1.bf16.msra.mxu0 %v319
      %338 = vmatprep.subr.bf16.mxu0 0
      %339 = vmatpush1.bf16.msra.mxu0 %v320
      %340 = vmatprep.subr.bf16.mxu0 0
      %341 = vmatpush1.bf16.msra.mxu0 %v321
      %342 = vmatprep.subr.bf16.mxu0 0
      %343 = vmatpush1.bf16.msra.mxu0 %v322
      %344 = vmatprep.subr.bf16.mxu0 0
      %345 = vmatpush1.bf16.msra.mxu0 %v323
      %346 = vmatprep.subr.bf16.mxu0 0
      %347 = vmatpush1.bf16.msra.mxu0 %v324
      %348 = vmatprep.subr.bf16.mxu0 0
      %349 = vmatpush1.bf16.msra.mxu0 %v325
      %350 = vmatprep.subr.bf16.mxu0 0
      %351 = vmatpush1.bf16.msra.mxu0 0
      %352 = vmatprep.subr.bf16.mxu0 0
      %353 = vmatpush1.bf16.msra.mxu0 0
      %354 = vmatprep.subr.bf16.mxu0 0
      %355 = vmatpush1.bf16.msra.mxu0 0
      %356 = vmatprep.subr.bf16.mxu0 0
      %357 = vmatpush1.bf16.msra.mxu0 0
      %358 = vmatprep.subr.bf16.mxu0 0
      %359 = vmatpush1.bf16.msra.mxu0 0
      %360 = vmatprep.subr.bf16.mxu0 0
      %361 = vmatpush1.bf16.msra.mxu0 0
      %362 = vmatprep.subr.bf16.mxu0 0
      %363 = vmatpush1.bf16.msra.mxu0 0
      %364 = vmatprep.subr.bf16.mxu0 0
      %365 = vmatpush1.bf16.msra.mxu0 0
      %366 = vmatprep.mubr.bf16.mxu0 0
      %367 = vmatmul.mubr.bf16.gmra.mrb[0].mxu0 %v278
      %v368 = vpop.f32.mrb[0].mxu0
      %v369 = vadd.f32 0.0, %v368
      %v370 = vpop.f32.mrb[0].mxu0
      %v371 = vpop.f32.mrb[0].mxu0
      %v372 = vadd.f32 0.0, %v371
      %v373 = vpop.f32.mrb[0].mxu0
      %374 = vmatprep.mubr.bf16.mxu0 0
      %375 = vmatmul.mubr.bf16.gmra.mrb[0].mxu0 %v279
      %v376 = vpop.f32.mrb[0].mxu0
      %v377 = vadd.f32 0.0, %v376
      %v378 = vpop.f32.mrb[0].mxu0
      %v379 = vpop.f32.mrb[0].mxu0
      %v380 = vadd.f32 0.0, %v379
      %v381 = vpop.f32.mrb[0].mxu0
      %382 = vmatprep.mubr.bf16.mxu0 0
      %383 = vmatmul.mubr.bf16.gmra.mrb[0].mxu0 %v280
      %v384 = vpop.f32.mrb[0].mxu0
      %v385 = vadd.f32 0.0, %v384
      %v386 = vpop.f32.mrb[0].mxu0
      %v387 = vpop.f32.mrb[0].mxu0
      %v388 = vadd.f32 0.0, %v387
      %v389 = vpop.f32.mrb[0].mxu0
      %390 = vmatprep.mubr.bf16.mxu0 0
      %391 = vmatmul.mubr.bf16.gmra.mrb[0].mxu0 %v281
      %v392 = vpop.f32.mrb[0].mxu0
      %v393 = vadd.f32 0.0, %v392
      %v394 = vpop.f32.mrb[0].mxu0
      %v395 = vpop.f32.mrb[0].mxu0
      %v396 = vadd.f32 0.0, %v395
      %v397 = vpop.f32.mrb[0].mxu0
      %398 = vdwg.mxu0
      %v399 = vld [vmem:[%s230] sm:$0x1]
      %v401 = vlaneseq
      %v402 = vshrl.u32 %v401, 7
      %v403 = vsub.s32 0, %v402
      %v404 = vrot.slane %v399, %v403
      %v406 = vmul.f32 %v369, %v404
      %v407 = vmul.f32 %v372, %v404
      %v408 = vmul.f32 %v377, %v404
      %v409 = vmul.f32 %v380, %v404
      %v410 = vmul.f32 %v385, %v404
      %v411 = vmul.f32 %v388, %v404
      %v412 = vmul.f32 %v393, %v404
      %v413 = vmul.f32 %v396, %v404
      %414 = vst [vmem:[%s235] sm:$0xff] %v406
      %415 = vst [vmem:[%s235 + $0x8] sm:$0xff] %v407
      %416 = vst [vmem:[%s235 + $0x10] sm:$0xff] %v408
      %417 = vst [vmem:[%s235 + $0x18] sm:$0xff] %v409
      %418 = vst [vmem:[%s235 + $0x20] sm:$0xff] %v410
      %419 = vst [vmem:[%s235 + $0x28] sm:$0xff] %v411
      %420 = vst [vmem:[%s235 + $0x30] sm:$0xff] %v412
      %421 = vst [vmem:[%s235 + $0x38] sm:$0xff] %v413
      %p422 = scmp.eq.s32.totalorder %s17, 0
      // Predicated region
      $region33: #{basic_block_forward.2} parent=31 // pred_check
        %p423 = pneg %p422
      $region34: #{basic_block_forward.2} parent=31 // pred_check_branch
        %425 = sbr.rel (%p423) target = $region36
      $region35: #{basic_block_forward.2} parent=31 // pred_region
        %426 = vst [vmem:[%s4] sm:$0x1] 0.0
        %427 = vst [vmem:[%s5] sm:$0x1] 0.0
      $region36: #{basic_block_forward.2} parent=31 // pred_fallthru
        _
      %v428 = vld [vmem:[%s4] sm:$0x1]
      %v429 = vadd.f32 %v406, %v407
      %v430 = vadd.f32 %v429, %v408
      %v431 = vadd.f32 %v430, %v409
      %v432 = vadd.f32 %v431, %v410
      %v433 = vadd.f32 %v432, %v411
      %v434 = vadd.f32 %v433, %v412
      %v435 = vadd.f32 %v434, %v413
      %v436 = vrot.slane %v435, 4
      %v437 = vadd.f32 %v435, %v436
      %v438 = vrot.slane %v437, 2
      %v439 = vadd.f32 %v437, %v438
      %v440 = vrot.slane %v439, 1
      %v441 = vadd.f32 %v439, %v440
      %v442 = vadd.f32 %v428, %v441
      %443 = vst [vmem:[%s4] sm:$0x1] %v442
      %v444 = vld [vmem:[%s5] sm:$0x1]
      %v445 = vmul.f32 %v406, %v406
      %v446 = vmul.f32 %v407, %v407
      %v447 = vmul.f32 %v408, %v408
      %v448 = vmul.f32 %v409, %v409
      %v449 = vmul.f32 %v410, %v410
      %v450 = vmul.f32 %v411, %v411
      %v451 = vmul.f32 %v412, %v412
      %v452 = vmul.f32 %v413, %v413
      %v453 = vadd.f32 %v445, %v446
      %v454 = vadd.f32 %v453, %v447
      %v455 = vadd.f32 %v454, %v448
      %v456 = vadd.f32 %v455, %v449
      %v457 = vadd.f32 %v456, %v450
      %v458 = vadd.f32 %v457, %v451
      %v459 = vadd.f32 %v458, %v452
      %v460 = vrot.slane %v459, 4
      %v461 = vadd.f32 %v459, %v460
      %v462 = vrot.slane %v461, 2
      %v463 = vadd.f32 %v461, %v462
      %v464 = vrot.slane %v463, 1
      %v465 = vadd.f32 %v463, %v464
      %v466 = vadd.f32 %v444, %v465
      %467 = vst [vmem:[%s5] sm:$0x1] %v466
      %s468 = smul.u32 8, %s17
      %p469 = scmp.lt.s32.totalorder %s468, 15
      %s470 = scalar_select %p469, %s468, 15
      %s471 = smul.addr %s470, 8
      %s472 = scalar_lea.vmem %s3, %s471
      // Predicated region
      $region37: #{basic_block_forward.2} parent=31 // pred_check
        %p473 = pneg %p108
      $region38: #{basic_block_forward.2} parent=31 // pred_check_branch
        %475 = sbr.rel (%p473) target = $region40
      $region39: #{basic_block_forward.2} parent=31 // pred_region
        %s476 = smul.u32 8, %s17
      $region40: #{basic_block_forward.2} parent=31 // pred_fallthru
        _
      // Predicated region
      $region41: #{basic_block_forward.2} parent=31 // pred_check
        %p477 = pneg %p129
      $region42: #{basic_block_forward.2} parent=31 // pred_check_branch
        %479 = sbr.rel (%p477) target = $region44
      $region43: #{basic_block_forward.2} parent=31 // pred_region
        _
      $region44: #{basic_block_forward.2} parent=31 // pred_fallthru
        _
      // Predicated region
      $region45: #{basic_block_forward.2} parent=31 // pred_check
        %p480 = pneg %p150
      $region46: #{basic_block_forward.2} parent=31 // pred_check_branch
        %482 = sbr.rel (%p480) target = $region48
      $region47: #{basic_block_forward.2} parent=31 // pred_region
        _
      $region48: #{basic_block_forward.2} parent=31 // pred_fallthru
        _
      // Predicated region
      $region49: #{basic_block_forward.2} parent=31 // pred_check
        %p483 = pneg %p129
      $region50: #{basic_block_forward.2} parent=31 // pred_check_branch
        %485 = sbr.rel (%p483) target = $region52
      $region51: #{basic_block_forward.2} parent=31 // pred_region
        _
      $region52: #{basic_block_forward.2} parent=31 // pred_fallthru
        _
      // Predicated region
      $region53: #{basic_block_forward.2} parent=31 // pred_check
        %p486 = pneg %p150
      $region54: #{basic_block_forward.2} parent=31 // pred_check_branch
        %488 = sbr.rel (%p486) target = $region56
      $region55: #{basic_block_forward.2} parent=31 // pred_region
        _
      $region56: #{basic_block_forward.2} parent=31 // pred_fallthru
        _
    $region32: #{basic_block_forward.2} parent=5 // pred_fallthru
      _
    %p489 = scmp.le.s32.totalorder 2, %s12
    // Predicated region
    $region57: #{basic_block_forward.2} parent=5 // pred_check
      %p490 = pneg %p489
    $region58: #{basic_block_forward.2} parent=5 // pred_check_branch
      %492 = sbr.rel (%p490) target = $region60
    $region59: #{basic_block_forward.2} parent=5 // pred_region
      %s493 = ssub.s32 %s12, 2
      // Predicated region
      $region61: #{basic_block_forward.2} parent=59 // pred_check
        %p494 = pneg %p114
      $region62: #{basic_block_forward.2} parent=59 // pred_check_branch
        %496 = sbr.rel (%p494) target = $region64
      $region63: #{basic_block_forward.2} parent=59 // pred_region
        %s497 = smul.u32 8, %s18
        %p498 = scmp.lt.s32.totalorder %s497, 15
        %s499 = scalar_select %p498, %s497, 15
        %s500 = smul.addr %s499, 8
        %s501 = scalar_lea.vmem %s3, %s500
      $region64: #{basic_block_forward.2} parent=59 // pred_fallthru
        _
    $region60: #{basic_block_forward.2} parent=5 // pred_fallthru
      _
  $region6: #{basic_block_forward.2} parent=0 // loop_footer
    %s16 = sadd.s32 1, %s12
  $region7: #{basic_block_forward.2} parent=0 // loop_footer_branch
    %11 = sbr.rel target = $region3
  $region8: #{basic_block_forward.2} parent=0 // loop_exit
    _

</llo_original>
